<compile_context>
chip_gen: v7x
topology: tpu7x:2x2x1
jax: 0.10.0
libtpu: 0.0.40
codegen_flags: <defaults>
</compile_context>

<pallas_src>
import functools

import jax
import jax.numpy as jnp
from jax.experimental import pallas as pl
from jax.experimental.pallas import tpu as pltpu


_TM_MAX = 4096                    # hard cap on rows per grid step
_VMEM_TILE_BUDGET = 40 << 20      # budget for double-buffered blocks (v7x-safe)


def _cdiv(a, b):
    return -(-a // b)


def _round_up(v, m):
    return _cdiv(v, m) * m


def _pick_tile_m(m, n_lanes_out, p_lanes_in, out_itemsize):
    """Rows per grid step.

    - Big enough to amortize the ~0.35us per-step overhead (HBM-write bound).
    - Small enough that the double-buffered blocks fit the VMEM budget,
      counting the 128-lane padding of the (TM, P) input blocks.
    - >= 2 grid steps with an even step count when possible (v7x megacore).
    - Multiple of 8 (sublane).
    """
    per_row = (2 * n_lanes_out * out_itemsize        # output block, double-buffered
               + 2 * 2 * p_lanes_in * 4)             # two X blocks, lane-padded, dbl-buf
    tm_cap = max(8, min(_TM_MAX, (_VMEM_TILE_BUDGET // per_row) // 8 * 8))
    steps = max(2, 2 * _cdiv(_cdiv(m, tm_cap), 2))   # even, >= 2
    return min(tm_cap, _round_up(max(_cdiv(m, steps), 8), 8))


def _patch_embed_kernel(xl_ref, xt_ref, wl_ref, wt_ref, b_ref, out_ref):
    # xl/xt: (TM, P)   wl/wt: (P, E_pad)   b: (1, 2*E_pad)   out: (TM, 2*E_pad)
    lon = jnp.dot(xl_ref[...], wl_ref[...], preferred_element_type=jnp.float32)
    lat = jnp.dot(xt_ref[...], wt_ref[...], preferred_element_type=jnp.float32)
    acc = jnp.concatenate([lon, lat], axis=-1) + b_ref[...]
    out_ref[...] = acc.astype(out_ref.dtype)


def patch_embed_2d(x, w_lon, b_lon, w_lat, b_lat, patch_size, out_dtype=None):
    """x: (B, C, L); w_*: (E, 1, P) Conv1d weights; b_*: (E,). -> (B, 2*L//P, E)."""
    B, C, L = x.shape
    assert C >= 2
    P = patch_size
    assert L % P == 0, "traj_length must be divisible by patch_size"
    T = L // P
    E = w_lon.shape[0]
    M = B * T
    out_dtype = x.dtype if out_dtype is None else jnp.dtype(out_dtype)
    out_itemsize = jnp.dtype(out_dtype).itemsize

    # Lane-dense-store guard: 2*E_pad must be a multiple of 128.
    E_pad = _round_up(E, 64)
    N_out = 2 * E_pad

    # Patchify lon / lat separately (no concat pass over the input in HBM).
    x_lon = x[:, 0, :].reshape(M, P)
    x_lat = x[:, 1, :].reshape(M, P)

    # Conv1d(1, E, k=P, stride=P) == per-patch linear with weight (P, E).
    wl = jnp.transpose(w_lon[:, 0, :])                                # (P, E)
    wt = jnp.transpose(w_lat[:, 0, :])                                # (P, E)
    bl, bt = b_lon, b_lat
    if E_pad != E:
        wl = jnp.pad(wl, ((0, 0), (0, E_pad - E)))
        wt = jnp.pad(wt, ((0, 0), (0, E_pad - E)))
        bl = jnp.pad(bl, (0, E_pad - E))
        bt = jnp.pad(bt, (0, E_pad - E))
    b_cat = jnp.concatenate([bl, bt]).reshape(1, N_out)               # (1, 2*E_pad)

    # Tile M; pad ragged edge with zero rows (sliced off afterwards).
    p_lanes = _round_up(P, 128)   # VMEM lane padding of the (TM, P) input blocks
    TM = _pick_tile_m(M, N_out, p_lanes, out_itemsize)
    n_steps = _cdiv(M, TM)
    M_pad = n_steps * TM
    if M_pad != M:
        x_lon = jnp.pad(x_lon, ((0, M_pad - M), (0, 0)))
        x_lat = jnp.pad(x_lat, ((0, M_pad - M), (0, 0)))

    # Actual double-buffered VMEM footprint (inputs lane-padded!) + slack.
    in_bytes = 2 * 2 * TM * p_lanes * 4
    out_bytes = 2 * TM * N_out * out_itemsize
    w_bytes = 2 * 2 * _round_up(P, 8) * E_pad * 4
    bias_bytes = 2 * 8 * N_out * 4
    footprint = in_bytes + out_bytes + w_bytes + bias_bytes
    vmem_limit = int(min(56 << 20, max(32 << 20, footprint + footprint // 4 + (2 << 20))))

    cost = pl.CostEstimate(
        flops=2 * M * P * 2 * E,
        transcendentals=0,
        bytes_accessed=4 * (2 * M * P + 2 * P * E + 2 * E) + out_itemsize * M * 2 * E,
    )

    out = pl.pallas_call(
        _patch_embed_kernel,
        out_shape=jax.ShapeDtypeStruct((M_pad, N_out), out_dtype),
        grid_spec=pltpu.PrefetchScalarGridSpec(
            num_scalar_prefetch=0,
            grid=(n_steps,),
            in_specs=[
                pl.BlockSpec((TM, P), lambda i: (i, 0)),        # x_lon
                pl.BlockSpec((TM, P), lambda i: (i, 0)),        # x_lat
                pl.BlockSpec((P, E_pad), lambda i: (0, 0)),     # w_lon
                pl.BlockSpec((P, E_pad), lambda i: (0, 0)),     # w_lat
                pl.BlockSpec((1, N_out), lambda i: (0, 0)),     # bias
            ],
            out_specs=pl.BlockSpec((TM, N_out), lambda i: (i, 0)),
        ),
        compiler_params=pltpu.CompilerParams(
            dimension_semantics=("parallel",),
            vmem_limit_bytes=vmem_limit,
        ),
        cost_estimate=cost,
    )(x_lon, x_lat, wl, wt, b_cat)

    # (M, 2*E_pad) -> (B, 2T, E_pad): pure reshape == PyTorch lon/lat interleave
    # (lon at even seq positions, lat at odd).  Slice off lane padding if any.
    out = out[:M].reshape(B, 2 * T, E_pad)
    if E_pad != E:
        out = out[:, :, :E]
    return out


def _reference(x, w_lon, b_lon, w_lat, b_lat, P):
    """Pure-JAX replica of the PyTorch forward (for correctness check)."""
    B, C, L = x.shape
    E = w_lon.shape[0]
    T = L // P
    xl = x[:, 0, :].reshape(B, T, P)
    xt = x[:, 1, :].reshape(B, T, P)
    lon = jnp.einsum("btp,ep->bte", xl, w_lon[:, 0, :]) + b_lon
    lat = jnp.einsum("btp,ep->bte", xt, w_lat[:, 0, :]) + b_lat
    return jnp.stack([lon, lat], axis=2).reshape(B, 2 * T, E)


if __name__ == "__main__":
    # Small, forward-consistent shapes: B=2, C=2 (lon/lat), L=16, P=2, E=128.
    B, C, L = 2, 2, 16
    P = 2
    E = 128

    key = jax.random.PRNGKey(0)
    kx, kwl, kbl, kwt, kbt = jax.random.split(key, 5)
    x = jax.random.normal(kx, (B, C, L), dtype=jnp.float32)
    # Conv1d(1, E, kernel_size=P) parameter shapes: weight (E, 1, P), bias (E,)
    w_lon = jax.random.normal(kwl, (E, 1, P), dtype=jnp.float32) * 0.1
    b_lon = jax.random.normal(kbl, (E,), dtype=jnp.float32) * 0.1
    w_lat = jax.random.normal(kwt, (E, 1, P), dtype=jnp.float32) * 0.1
    b_lat = jax.random.normal(kbt, (E,), dtype=jnp.float32) * 0.1

    run = jax.jit(functools.partial(patch_embed_2d, patch_size=P))
    out = run(x, w_lon, b_lon, w_lat, b_lat)
    out = jax.block_until_ready(out)

    expected = _reference(x, w_lon, b_lon, w_lat, b_lat, P)
    assert out.shape == (B, (L // P) * 2, E), out.shape
    assert jnp.allclose(out, expected, atol=1e-5, rtol=1e-5), "mismatch vs reference"

    print("KERNEL_OK")
</pallas_src>

<mosaic_0001>
module attributes {stable_mosaic.version = 11 : i64} {
  func.func @_patch_embed_kernel(%arg0: i32, %arg1: memref<8x2xf32, #tpu.memory_space<vmem>>, %arg2: memref<8x2xf32, #tpu.memory_space<vmem>>, %arg3: memref<2x128xf32, #tpu.memory_space<vmem>>, %arg4: memref<2x128xf32, #tpu.memory_space<vmem>>, %arg5: memref<1x256xf32, #tpu.memory_space<vmem>>, %arg6: memref<8x256xf32, #tpu.memory_space<vmem>>) attributes {dimension_semantics = [#tpu.dimension_semantics<parallel>], iteration_bounds = array<i64: 2>, scalar_prefetch = 0 : i64, scratch_operands = 0 : i64, tpu.core_type = #tpu.core_type<tc>, window_params = [{transform_indices = @transform_0, window_bounds = array<i64: 8, 2>}, {transform_indices = @transform_1, window_bounds = array<i64: 8, 2>}, {pipeline_mode = #tpu.pipeline_mode<synchronous>, transform_indices = @transform_2, window_bounds = array<i64: 2, 128>}, {pipeline_mode = #tpu.pipeline_mode<synchronous>, transform_indices = @transform_3, window_bounds = array<i64: 2, 128>}, {pipeline_mode = #tpu.pipeline_mode<synchronous>, transform_indices = @transform_4, window_bounds = array<i64: 1, 256>}, {transform_indices = @transform_5, window_bounds = array<i64: 8, 256>}]} {
    %c0 = arith.constant 0 : index
    %c0_0 = arith.constant 0 : index
    %0 = vector.load %arg1[%c0, %c0_0] : memref<8x2xf32, #tpu.memory_space<vmem>>, vector<8x2xf32>
    %c0_1 = arith.constant 0 : index
    %c0_2 = arith.constant 0 : index
    %1 = vector.load %arg3[%c0_1, %c0_2] : memref<2x128xf32, #tpu.memory_space<vmem>>, vector<2x128xf32>
    %cst = arith.constant dense<0.000000e+00> : vector<8x128xf32>
    %2 = tpu.matmul %0, %1, %cst {dimension_numbers = #tpu.dot_dimension_numbers<[1], [0], [0], [1], [0, 0, 1, 1], [], []>} : vector<8x2xf32>, vector<2x128xf32>, vector<8x128xf32> -> vector<8x128xf32>
    %c0_3 = arith.constant 0 : index
    %c0_4 = arith.constant 0 : index
    %3 = vector.load %arg2[%c0_3, %c0_4] : memref<8x2xf32, #tpu.memory_space<vmem>>, vector<8x2xf32>
    %c0_5 = arith.constant 0 : index
    %c0_6 = arith.constant 0 : index
    %4 = vector.load %arg4[%c0_5, %c0_6] : memref<2x128xf32, #tpu.memory_space<vmem>>, vector<2x128xf32>
    %cst_7 = arith.constant dense<0.000000e+00> : vector<8x128xf32>
    %5 = tpu.matmul %3, %4, %cst_7 {dimension_numbers = #tpu.dot_dimension_numbers<[1], [0], [0], [1], [0, 0, 1, 1], [], []>} : vector<8x2xf32>, vector<2x128xf32>, vector<8x128xf32> -> vector<8x128xf32>
    %6 = tpu.concatenate %2, %5 in 1 : vector<8x128xf32>, vector<8x128xf32> -> vector<8x256xf32>
    %c0_8 = arith.constant 0 : index
    %c0_9 = arith.constant 0 : index
    %7 = vector.load %arg5[%c0_8, %c0_9] : memref<1x256xf32, #tpu.memory_space<vmem>>, vector<1x256xf32>
    %8 = vector.broadcast %7 : vector<1x256xf32> to vector<8x256xf32>
    %9 = arith.addf %6, %8 : vector<8x256xf32>
    %c0_10 = arith.constant 0 : index
    %c0_11 = arith.constant 0 : index
    %10 = vector.load %arg6[%c0_10, %c0_11] : memref<8x256xf32, #tpu.memory_space<vmem>>, vector<8x256xf32>
    tpu.vector_store %arg6[%c0_10, %c0_11], %9 {strides = array<i32>} : memref<8x256xf32, #tpu.memory_space<vmem>>, vector<8x256xf32>,
    return
  }
  func.func @transform_0(%arg0: i32) -> (i32, i32) {
    %c0_i32 = arith.constant 0 : i32
    %c0_i32_0 = arith.constant 0 : i32
    return %arg0, %c0_i32 : i32, i32
  }
  func.func @transform_1(%arg0: i32) -> (i32, i32) {
    %c0_i32 = arith.constant 0 : i32
    %c0_i32_0 = arith.constant 0 : i32
    return %arg0, %c0_i32 : i32, i32
  }
  func.func @transform_2(%arg0: i32) -> (i32, i32) {
    %c0_i32 = arith.constant 0 : i32
    %c0_i32_0 = arith.constant 0 : i32
    %c0_i32_1 = arith.constant 0 : i32
    return %c0_i32, %c0_i32_0 : i32, i32
  }
  func.func @transform_3(%arg0: i32) -> (i32, i32) {
    %c0_i32 = arith.constant 0 : i32
    %c0_i32_0 = arith.constant 0 : i32
    %c0_i32_1 = arith.constant 0 : i32
    return %c0_i32, %c0_i32_0 : i32, i32
  }
  func.func @transform_4(%arg0: i32) -> (i32, i32) {
    %c0_i32 = arith.constant 0 : i32
    %c0_i32_0 = arith.constant 0 : i32
    %c0_i32_1 = arith.constant 0 : i32
    return %c0_i32, %c0_i32_0 : i32, i32
  }
  func.func @transform_5(%arg0: i32) -> (i32, i32) {
    %c0_i32 = arith.constant 0 : i32
    %c0_i32_0 = arith.constant 0 : i32
    return %arg0, %c0_i32 : i32, i32
  }
}

</mosaic_0001>

<llo_original>
// kernel: squeeze.5
$region0: #{squeeze.5}
  %s0 = inlined_call_operand.vmem [shape: f32[2,16], index: 0, kind: input, shape index: {}]
  %s1 = inlined_call_operand.vmem [shape: f32[16,2], index: 1, kind: output, shape index: {}]
  $region1: #{squeeze.5} parent=0
    #allocation0 [shape = 'u8[4096]{0}', space=vmem, size = 0x1000, scoped, tag = 'scoped mem for input reshape']
    %s3 = sshllo.u32 0, 2
    %v4 = vld [vmem:[%s0] sm:%s3]
    %5 = vst [vmem:[#allocation0] sm:%s3] %v4
    %v6 = vld [vmem:[#allocation0] sm:$0x3]
    %vm7 = vcmask 15360
    %8 = vst.msk [vmem:[%s1] ss:$8 sm:$0x3] %vm7, %v6
    %v9 = vld [vmem:[#allocation0] sm:$0x3]
    %10 = vrot.lane.b32.xlu0 %v9, 126
    %v11 = vpop.permute.xlu0 %10
    %vm12 = vcmask 15360
    %s13 = scalar_lea.vmem %s1, 1
    %14 = vst.msk [vmem:[%s13] ss:$8 sm:$0x3] %vm12, %v11
    %v15 = vld [vmem:[#allocation0] sm:$0x3]
    %16 = vrot.lane.b32.xlu0 %v15, 124
    %v17 = vpop.permute.xlu0 %16
    %vm18 = vcmask 15360
    %s19 = scalar_lea.vmem %s1, 2
    %20 = vst.msk [vmem:[%s19] ss:$8 sm:$0x3] %vm18, %v17
    %v21 = vld [vmem:[#allocation0] sm:$0x3]
    %22 = vrot.lane.b32.xlu0 %v21, 122
    %v23 = vpop.permute.xlu0 %22
    %vm24 = vcmask 15360
    %s25 = scalar_lea.vmem %s1, 3
    %26 = vst.msk [vmem:[%s25] ss:$8 sm:$0x3] %vm24, %v23
    %v27 = vld [vmem:[#allocation0] sm:$0x3]
    %28 = vrot.lane.b32.xlu0 %v27, 120
    %v29 = vpop.permute.xlu0 %28
    %vm30 = vcmask 15360
    %s31 = scalar_lea.vmem %s1, 4
    %32 = vst.msk [vmem:[%s31] ss:$8 sm:$0x3] %vm30, %v29
    %v33 = vld [vmem:[#allocation0] sm:$0x3]
    %34 = vrot.lane.b32.xlu0 %v33, 118
    %v35 = vpop.permute.xlu0 %34
    %vm36 = vcmask 15360
    %s37 = scalar_lea.vmem %s1, 5
    %38 = vst.msk [vmem:[%s37] ss:$8 sm:$0x3] %vm36, %v35
    %v39 = vld [vmem:[#allocation0] sm:$0x3]
    %40 = vrot.lane.b32.xlu0 %v39, 116
    %v41 = vpop.permute.xlu0 %40
    %vm42 = vcmask 15360
    %s43 = scalar_lea.vmem %s1, 6
    %44 = vst.msk [vmem:[%s43] ss:$8 sm:$0x3] %vm42, %v41
    %v45 = vld [vmem:[#allocation0] sm:$0x3]
    %46 = vrot.lane.b32.xlu0 %v45, 114
    %v47 = vpop.permute.xlu0 %46
    %vm48 = vcmask 15360
    %s49 = scalar_lea.vmem %s1, 7
    %50 = vst.msk [vmem:[%s49] ss:$8 sm:$0x3] %vm48, %v47

// kernel: patch_embed_2d.1
$region0: #{patch_embed_2d.1}
  #allocation0 [shape = 'u32[]', space=smem, size = 0x4, offset = 0x4, fixed_abs, tag = 'smem constant byte address 0x4 - core index']
  #allocation1 [shape = 'u32[144,128]{1,0:T(1,128)}', space=vmem, size = 0x12000, scoped, tag = 'internal scratch']
  %s0 = inlined_call_operand.vmem [shape: f32[16,2], index: 0, kind: input, shape index: {}]
  %s1 = inlined_call_operand.vmem [shape: f32[16,2], index: 1, kind: input, shape index: {}]
  %s2 = inlined_call_operand.vmem [shape: f32[2,128], index: 2, kind: input, shape index: {}]
  %s3 = inlined_call_operand.vmem [shape: f32[2,128], index: 3, kind: input, shape index: {}]
  %s4 = inlined_call_operand.vmem [shape: f32[1,256], index: 4, kind: input, shape index: {}]
  %s5 = inlined_call_operand.vmem [shape: f32[16,256], index: 5, kind: output, shape index: {}]
  %s6 = sld [smem:[#allocation0]]
  $region53: #{patch_embed_2d.1} parent=0
    _
  %s8 = ssub.s32 1, %s6
  %s9 = scalar_select 0, %s8, %s6
  loop: start=0, step=1, limit=4
  $region2: #{patch_embed_2d.1} parent=0 // loop_pre_header
    _
  $region3: #{patch_embed_2d.1} parent=0 // loop_header
    %s11 = sphi 0, %s15
    %p12 = scmp.ge.s32.totalorder %s11, 4
    %s21 = sphi 0, %s23
    %s24 = sphi 0, %s21
    %s25 = sphi 0, %s24
    %s41 = sphi 0, %s25
    %s47 = sphi 0, %s49
    %s50 = sphi 0, %s47
    %s51 = sphi 0, %s50
    %s67 = sphi 0, %s51
    %s71 = sphi 0, %s71
    %s73 = sphi 0, %s71
    %s74 = sphi 0, %s73
    %s88 = sphi 0, %s74
    %s92 = sphi 0, %s92
    %s94 = sphi 0, %s92
    %s95 = sphi 0, %s94
    %s109 = sphi 0, %s95
    %s113 = sphi 0, %s113
    %s115 = sphi 0, %s113
    %s116 = sphi 0, %s115
    %s130 = sphi 0, %s116
    %s136 = sphi 0, %s138
    %s139 = sphi 0, %s136
    %s140 = sphi 0, %s139
    %s156 = sphi 0, %s140
  $region4: #{patch_embed_2d.1} parent=0 // loop_header_branch
    %14 = sbr.rel (%p12) target = $region8
  $region5: #{patch_embed_2d.1} parent=0 // loop_body
    %s16 = ssub.s32 %s11, 1
    %s17 = ssub.s32 %s11, 2
    %s18 = sadd.s32 %s11, 1
    %s19 = ssub.s32 %s11, %s18
    %p20 = scmp.eq.s32.totalorder %s19, 0
    %s22 = sadd.s32 %s21, 1
    %s23 = scalar_select %p20, %s21, %s22
    %p26 = pneg %p20
    %p27 = scmp.eq.s32.totalorder %s11, 1
    %p28 = por %p26, %p27
    %p29 = scmp.ne.s32.totalorder %s21, %s24
    %p30 = scmp.eq.s32.totalorder %s11, 0
    %p31 = por %p29, %p30
    %p32 = scmp.ne.s32.totalorder %s21, %s24
    %p33 = scmp.eq.s32.totalorder %s16, 1
    %p34 = por %p32, %p33
    %p35 = scmp.ne.s32.totalorder %s24, %s25
    %p36 = scmp.eq.s32.totalorder %s16, 0
    %p37 = por %p35, %p36
    %p38 = scmp.ne.s32.totalorder %s24, %s25
    %p39 = scmp.eq.s32.totalorder %s17, 1
    %p40 = por %p38, %p39
    %p42 = scmp.ne.s32.totalorder %s25, %s41
    %p43 = scmp.eq.s32.totalorder %s17, 0
    %p44 = por %p42, %p43
    %s45 = ssub.s32 %s11, %s18
    %p46 = scmp.eq.s32.totalorder %s45, 0
    %s48 = sadd.s32 %s47, 1
    %s49 = scalar_select %p46, %s47, %s48
    %p52 = pneg %p46
    %p53 = scmp.eq.s32.totalorder %s11, 1
    %p54 = por %p52, %p53
    %p55 = scmp.ne.s32.totalorder %s47, %s50
    %p56 = scmp.eq.s32.totalorder %s11, 0
    %p57 = por %p55, %p56
    %p58 = scmp.ne.s32.totalorder %s47, %s50
    %p59 = scmp.eq.s32.totalorder %s16, 1
    %p60 = por %p58, %p59
    %p61 = scmp.ne.s32.totalorder %s50, %s51
    %p62 = scmp.eq.s32.totalorder %s16, 0
    %p63 = por %p61, %p62
    %p64 = scmp.ne.s32.totalorder %s50, %s51
    %p65 = scmp.eq.s32.totalorder %s17, 1
    %p66 = por %p64, %p65
    %p68 = scmp.ne.s32.totalorder %s51, %s67
    %p69 = scmp.eq.s32.totalorder %s17, 0
    %p70 = por %p68, %p69
    %s72 = sadd.s32 %s71, 1
    %p75 = scmp.eq.s32.totalorder %s11, 1
    %p76 = scmp.ne.s32.totalorder %s71, %s73
    %p77 = scmp.eq.s32.totalorder %s11, 0
    %p78 = por %p76, %p77
    %p79 = scmp.ne.s32.totalorder %s71, %s73
    %p80 = scmp.eq.s32.totalorder %s16, 1
    %p81 = por %p79, %p80
    %p82 = scmp.ne.s32.totalorder %s73, %s74
    %p83 = scmp.eq.s32.totalorder %s16, 0
    %p84 = por %p82, %p83
    %p85 = scmp.ne.s32.totalorder %s73, %s74
    %p86 = scmp.eq.s32.totalorder %s17, 1
    %p87 = por %p85, %p86
    %p89 = scmp.ne.s32.totalorder %s74, %s88
    %p90 = scmp.eq.s32.totalorder %s17, 0
    %p91 = por %p89, %p90
    %s93 = sadd.s32 %s92, 1
    %p96 = scmp.eq.s32.totalorder %s11, 1
    %p97 = scmp.ne.s32.totalorder %s92, %s94
    %p98 = scmp.eq.s32.totalorder %s11, 0
    %p99 = por %p97, %p98
    %p100 = scmp.ne.s32.totalorder %s92, %s94
    %p101 = scmp.eq.s32.totalorder %s16, 1
    %p102 = por %p100, %p101
    %p103 = scmp.ne.s32.totalorder %s94, %s95
    %p104 = scmp.eq.s32.totalorder %s16, 0
    %p105 = por %p103, %p104
    %p106 = scmp.ne.s32.totalorder %s94, %s95
    %p107 = scmp.eq.s32.totalorder %s17, 1
    %p108 = por %p106, %p107
    %p110 = scmp.ne.s32.totalorder %s95, %s109
    %p111 = scmp.eq.s32.totalorder %s17, 0
    %p112 = por %p110, %p111
    %s114 = sadd.s32 %s113, 1
    %p117 = scmp.eq.s32.totalorder %s11, 1
    %p118 = scmp.ne.s32.totalorder %s113, %s115
    %p119 = scmp.eq.s32.totalorder %s11, 0
    %p120 = por %p118, %p119
    %p121 = scmp.ne.s32.totalorder %s113, %s115
    %p122 = scmp.eq.s32.totalorder %s16, 1
    %p123 = por %p121, %p122
    %p124 = scmp.ne.s32.totalorder %s115, %s116
    %p125 = scmp.eq.s32.totalorder %s16, 0
    %p126 = por %p124, %p125
    %p127 = scmp.ne.s32.totalorder %s115, %s116
    %p128 = scmp.eq.s32.totalorder %s17, 1
    %p129 = por %p127, %p128
    %p131 = scmp.ne.s32.totalorder %s116, %s130
    %p132 = scmp.eq.s32.totalorder %s17, 0
    %p133 = por %p131, %p132
    %s134 = ssub.s32 %s11, %s18
    %p135 = scmp.eq.s32.totalorder %s134, 0
    %s137 = sadd.s32 %s136, 1
    %s138 = scalar_select %p135, %s136, %s137
    %p141 = pneg %p135
    %p142 = scmp.eq.s32.totalorder %s11, 1
    %p143 = por %p141, %p142
    %p144 = scmp.ne.s32.totalorder %s136, %s139
    %p145 = scmp.eq.s32.totalorder %s11, 0
    %p146 = por %p144, %p145
    %p147 = scmp.ne.s32.totalorder %s136, %s139
    %p148 = scmp.eq.s32.totalorder %s16, 1
    %p149 = por %p147, %p148
    %p150 = scmp.ne.s32.totalorder %s139, %s140
    %p151 = scmp.eq.s32.totalorder %s16, 0
    %p152 = por %p150, %p151
    %p153 = scmp.ne.s32.totalorder %s139, %s140
    %p154 = scmp.eq.s32.totalorder %s17, 1
    %p155 = por %p153, %p154
    %p157 = scmp.ne.s32.totalorder %s140, %s156
    %p158 = scmp.eq.s32.totalorder %s17, 0
    %p159 = por %p157, %p158
    %p160 = scmp.le.s32.totalorder 1, %s11
    %p161 = scmp.lt.s32.totalorder %s11, 3
    %p162 = pnand %p160, %p161
    %p163 = pneg %p162
    // Predicated region
    $region9: #{patch_embed_2d.1} parent=5 // pred_check
      _
    $region10: #{patch_embed_2d.1} parent=5 // pred_check_branch
      %165 = sbr.rel (%p162) target = $region12
    $region11: #{patch_embed_2d.1} parent=5 // pred_region
      %s166 = ssub.s32 %s11, 1
      // Predicated region
      $region13: #{patch_embed_2d.1} parent=11 // pred_check
        %p167 = pneg %p84
      $region14: #{patch_embed_2d.1} parent=11 // pred_check_branch
        %169 = sbr.rel (%p167) target = $region16
      $region15: #{patch_embed_2d.1} parent=11 // pred_region
        _
      $region16: #{patch_embed_2d.1} parent=11 // pred_fallthru
        _
      // Predicated region
      $region17: #{patch_embed_2d.1} parent=11 // pred_check
        %p170 = pneg %p105
      $region18: #{patch_embed_2d.1} parent=11 // pred_check_branch
        %172 = sbr.rel (%p170) target = $region20
      $region19: #{patch_embed_2d.1} parent=11 // pred_region
        _
      $region20: #{patch_embed_2d.1} parent=11 // pred_fallthru
        _
      // Predicated region
      $region21: #{patch_embed_2d.1} parent=11 // pred_check
        %p173 = pneg %p126
      $region22: #{patch_embed_2d.1} parent=11 // pred_check_branch
        %175 = sbr.rel (%p173) target = $region24
      $region23: #{patch_embed_2d.1} parent=11 // pred_region
        _
      $region24: #{patch_embed_2d.1} parent=11 // pred_fallthru
        _
    $region12: #{patch_embed_2d.1} parent=5 // pred_fallthru
      _
    %p176 = scmp.lt.s32.totalorder %s11, 2
    // Predicated region
    $region25: #{patch_embed_2d.1} parent=5 // pred_check
      %p177 = pneg %p176
    $region26: #{patch_embed_2d.1} parent=5 // pred_check_branch
      %179 = sbr.rel (%p177) target = $region28
    $region27: #{patch_embed_2d.1} parent=5 // pred_region
      // Predicated region
      $region29: #{patch_embed_2d.1} parent=27 // pred_check
        %p180 = pneg %p31
      $region30: #{patch_embed_2d.1} parent=27 // pred_check_branch
        %182 = sbr.rel (%p180) target = $region32
      $region31: #{patch_embed_2d.1} parent=27 // pred_region
        %p183 = scmp.lt.s32.totalorder %s11, 1
        %s184 = scalar_select %p183, %s11, 1
        %s185 = smul.addr %s184, 8
        %s186 = scalar_lea.vmem %s0, %s185
      $region32: #{patch_embed_2d.1} parent=27 // pred_fallthru
        _
      // Predicated region
      $region33: #{patch_embed_2d.1} parent=27 // pred_check
        %p187 = pneg %p57
      $region34: #{patch_embed_2d.1} parent=27 // pred_check_branch
        %189 = sbr.rel (%p187) target = $region36
      $region35: #{patch_embed_2d.1} parent=27 // pred_region
        %p190 = scmp.lt.s32.totalorder %s11, 1
        %s191 = scalar_select %p190, %s11, 1
        %s192 = smul.addr %s191, 8
        %s193 = scalar_lea.vmem %s1, %s192
      $region36: #{patch_embed_2d.1} parent=27 // pred_fallthru
        _
    $region28: #{patch_embed_2d.1} parent=5 // pred_fallthru
      _
    %p194 = scmp.le.s32.totalorder 1, %s11
    %p195 = scmp.lt.s32.totalorder %s11, 3
    %p196 = pnand %p194, %p195
    %p197 = pneg %p196
    // Predicated region
    $region37: #{patch_embed_2d.1} parent=5 // pred_check
      _
    $region38: #{patch_embed_2d.1} parent=5 // pred_check_branch
      %199 = sbr.rel (%p196) target = $region40
    $region39: #{patch_embed_2d.1} parent=5 // pred_region
      %s200 = ssub.s32 %s11, 1
      %p201 = scmp.lt.s32.totalorder %s16, 1
      %s202 = scalar_select %p201, %s16, 1
      %s203 = smul.addr %s202, 8
      %s204 = scalar_lea.vmem %s0, %s203
      %p205 = pneg %p37
      %p206 = pneg %p34
      %p207 = scmp.lt.s32.totalorder %s16, 1
      %s208 = scalar_select %p207, %s16, 1
      %s209 = smul.addr %s208, 8
      %s210 = scalar_lea.vmem %s1, %s209
      %p211 = pneg %p63
      %p212 = pneg %p60
      %p213 = pneg %p84
      %p214 = pneg %p81
      %p215 = pneg %p105
      %p216 = pneg %p102
      %p217 = pneg %p126
      %p218 = pneg %p123
      %p219 = pneg %p152
      %p220 = pneg %p149
      %p221 = scmp.lt.s32.totalorder %s16, 1
      %s222 = scalar_select %p221, %s16, 1
      %s223 = smul.addr %s222, 2
      %s224 = smul.addr %s223, 8
      %s225 = scalar_lea.vmem %s5, %s224
      %p226 = scmp.lt.s32.totalorder %s16, 1
      %s227 = scalar_select %p226, %s16, 1
      %s228 = smul.addr %s227, 8
      %s229 = scalar_lea.vmem %s0, %s228
      %p230 = scmp.lt.s32.totalorder %s16, 1
      %s231 = scalar_select %p230, %s16, 1
      %s232 = smul.addr %s231, 8
      %s233 = scalar_lea.vmem %s1, %s232
      %p234 = scmp.lt.s32.totalorder %s16, 1
      %s235 = scalar_select %p234, %s16, 1
      %s236 = smul.addr %s235, 2
      %s237 = smul.addr %s236, 8
      %s238 = scalar_lea.vmem %s5, %s237
      %v239 = vld [vmem:[%s229] sm:$0xff]
      %v240 = vld [vmem:[%s2] sm:$0x3]
      %vm241 = vcmask 15360
      %v243 = vsel %vm241, %v239, 0
      %vm245 = vcmask 1041408
      %v247 = vsel %vm245, %v240, 0
      %249 = vmatprep.subr.mxu0 0.0
      %250 = vmatpush1.msra.mxu0 %v247
      %251 = vmatprep.subr.mxu0 0.0
      %252 = vmatpush1.msra.mxu0 0.0
      %253 = vmatprep.subr.mxu0 0.0
      %254 = vmatpush1.msra.mxu0 0.0
      %255 = vmatprep.subr.mxu0 0.0
      %256 = vmatpush1.msra.mxu0 0.0
      %257 = vmatprep.subr.mxu0 0.0
      %258 = vmatpush1.msra.mxu0 0.0
      %259 = vmatprep.subr.mxu0 0.0
      %260 = vmatpush1.msra.mxu0 0.0
      %261 = vmatprep.subr.mxu0 0.0
      %262 = vmatpush1.msra.mxu0 0.0
      %263 = vmatprep.subr.mxu0 0.0
      %264 = vmatpush1.msra.mxu0 0.0
      %265 = vmatprep.subr.mxu0 0.0
      %266 = vmatpush1.msra.mxu0 0.0
      %267 = vmatprep.subr.mxu0 0.0
      %268 = vmatpush1.msra.mxu0 0.0
      %269 = vmatprep.subr.mxu0 0.0
      %270 = vmatpush1.msra.mxu0 0.0
      %271 = vmatprep.subr.mxu0 0.0
      %272 = vmatpush1.msra.mxu0 0.0
      %273 = vmatprep.subr.mxu0 0.0
      %274 = vmatpush1.msra.mxu0 0.0
      %275 = vmatprep.subr.mxu0 0.0
      %276 = vmatpush1.msra.mxu0 0.0
      %277 = vmatprep.subr.mxu0 0.0
      %278 = vmatpush1.msra.mxu0 0.0
      %279 = vmatprep.subr.mxu0 0.0
      %280 = vmatpush1.msra.mxu0 0.0
      %281 = vmatprep.subr.mxu0 0.0
      %282 = vmatpush1.msra.mxu0 0.0
      %283 = vmatprep.subr.mxu0 0.0
      %284 = vmatpush1.msra.mxu0 0.0
      %285 = vmatprep.subr.mxu0 0.0
      %286 = vmatpush1.msra.mxu0 0.0
      %287 = vmatprep.subr.mxu0 0.0
      %288 = vmatpush1.msra.mxu0 0.0
      %289 = vmatprep.subr.mxu0 0.0
      %290 = vmatpush1.msra.mxu0 0.0
      %291 = vmatprep.subr.mxu0 0.0
      %292 = vmatpush1.msra.mxu0 0.0
      %293 = vmatprep.subr.mxu0 0.0
      %294 = vmatpush1.msra.mxu0 0.0
      %295 = vmatprep.subr.mxu0 0.0
      %296 = vmatpush1.msra.mxu0 0.0
      %297 = vmatprep.subr.mxu0 0.0
      %298 = vmatpush1.msra.mxu0 0.0
      %299 = vmatprep.subr.mxu0 0.0
      %300 = vmatpush1.msra.mxu0 0.0
      %301 = vmatprep.subr.mxu0 0.0
      %302 = vmatpush1.msra.mxu0 0.0
      %303 = vmatprep.subr.mxu0 0.0
      %304 = vmatpush1.msra.mxu0 0.0
      %305 = vmatprep.subr.mxu0 0.0
      %306 = vmatpush1.msra.mxu0 0.0
      %307 = vmatprep.subr.mxu0 0.0
      %308 = vmatpush1.msra.mxu0 0.0
      %309 = vmatprep.subr.mxu0 0.0
      %310 = vmatpush1.msra.mxu0 0.0
      %311 = vmatprep.subr.mxu0 0.0
      %312 = vmatpush1.msra.mxu0 0.0
      %313 = vmatprep.mubr.f32.mxu0 0.0
      %314 = vmatmul.mubr.f32.gmra.mrb[0].mxu0 %v243
      %v315 = vpop.f32.mrb[0].mxu0
      %v316 = vadd.f32 0.0, %v315
      %v317 = vpop.f32.mrb[0].mxu0
      %318 = vdwg.mxu0
      %v319 = vld [vmem:[%s233] sm:$0xff]
      %v320 = vld [vmem:[%s3] sm:$0x3]
      %v322 = vsel %vm241, %v319, 0
      %v325 = vsel %vm245, %v320, 0
      %327 = vmatprep.subr.mxu0 0.0
      %328 = vmatpush1.msra.mxu0 %v325
      %329 = vmatprep.subr.mxu0 0.0
      %330 = vmatpush1.msra.mxu0 0.0
      %331 = vmatprep.subr.mxu0 0.0
      %332 = vmatpush1.msra.mxu0 0.0
      %333 = vmatprep.subr.mxu0 0.0
      %334 = vmatpush1.msra.mxu0 0.0
      %335 = vmatprep.subr.mxu0 0.0
      %336 = vmatpush1.msra.mxu0 0.0
      %337 = vmatprep.subr.mxu0 0.0
      %338 = vmatpush1.msra.mxu0 0.0
      %339 = vmatprep.subr.mxu0 0.0
      %340 = vmatpush1.msra.mxu0 0.0
      %341 = vmatprep.subr.mxu0 0.0
      %342 = vmatpush1.msra.mxu0 0.0
      %343 = vmatprep.subr.mxu0 0.0
      %344 = vmatpush1.msra.mxu0 0.0
      %345 = vmatprep.subr.mxu0 0.0
      %346 = vmatpush1.msra.mxu0 0.0
      %347 = vmatprep.subr.mxu0 0.0
      %348 = vmatpush1.msra.mxu0 0.0
      %349 = vmatprep.subr.mxu0 0.0
      %350 = vmatpush1.msra.mxu0 0.0
      %351 = vmatprep.subr.mxu0 0.0
      %352 = vmatpush1.msra.mxu0 0.0
      %353 = vmatprep.subr.mxu0 0.0
      %354 = vmatpush1.msra.mxu0 0.0
      %355 = vmatprep.subr.mxu0 0.0
      %356 = vmatpush1.msra.mxu0 0.0
      %357 = vmatprep.subr.mxu0 0.0
      %358 = vmatpush1.msra.mxu0 0.0
      %359 = vmatprep.subr.mxu0 0.0
      %360 = vmatpush1.msra.mxu0 0.0
      %361 = vmatprep.subr.mxu0 0.0
      %362 = vmatpush1.msra.mxu0 0.0
      %363 = vmatprep.subr.mxu0 0.0
      %364 = vmatpush1.msra.mxu0 0.0
      %365 = vmatprep.subr.mxu0 0.0
      %366 = vmatpush1.msra.mxu0 0.0
      %367 = vmatprep.subr.mxu0 0.0
      %368 = vmatpush1.msra.mxu0 0.0
      %369 = vmatprep.subr.mxu0 0.0
      %370 = vmatpush1.msra.mxu0 0.0
      %371 = vmatprep.subr.mxu0 0.0
      %372 = vmatpush1.msra.mxu0 0.0
      %373 = vmatprep.subr.mxu0 0.0
      %374 = vmatpush1.msra.mxu0 0.0
      %375 = vmatprep.subr.mxu0 0.0
      %376 = vmatpush1.msra.mxu0 0.0
      %377 = vmatprep.subr.mxu0 0.0
      %378 = vmatpush1.msra.mxu0 0.0
      %379 = vmatprep.subr.mxu0 0.0
      %380 = vmatpush1.msra.mxu0 0.0
      %381 = vmatprep.subr.mxu0 0.0
      %382 = vmatpush1.msra.mxu0 0.0
      %383 = vmatprep.subr.mxu0 0.0
      %384 = vmatpush1.msra.mxu0 0.0
      %385 = vmatprep.subr.mxu0 0.0
      %386 = vmatpush1.msra.mxu0 0.0
      %387 = vmatprep.subr.mxu0 0.0
      %388 = vmatpush1.msra.mxu0 0.0
      %389 = vmatprep.subr.mxu0 0.0
      %390 = vmatpush1.msra.mxu0 0.0
      %391 = vmatprep.mubr.f32.mxu0 0.0
      %392 = vmatmul.mubr.f32.gmra.mrb[0].mxu0 %v322
      %v393 = vpop.f32.mrb[0].mxu0
      %v394 = vadd.f32 0.0, %v393
      %v395 = vpop.f32.mrb[0].mxu0
      %396 = vdwg.mxu0
      %v397 = vld [vmem:[%s4] sm:$0x3]
      %v399 = vlaneseq
      %v400 = vshrl.u32 %v399, 7
      %v401 = vsub.s32 0, %v400
      %v402 = vrot.slane %v397, %v401
      %v403 = vlaneseq
      %v404 = vshrl.u32 %v403, 7
      %v405 = vsub.s32 1, %v404
      %v406 = vrot.slane %v397, %v405
      %v409 = vadd.f32 %v316, %v402
      %v410 = vadd.f32 %v394, %v406
      %411 = vst [vmem:[%s238] sm:$0xff] %v409
      %412 = vst [vmem:[%s238 + $0x8] sm:$0xff] %v410
      %p413 = scmp.lt.s32.totalorder %s16, 1
      %s414 = scalar_select %p413, %s16, 1
      %s415 = smul.addr %s414, 2
      %s416 = smul.addr %s415, 8
      %s417 = scalar_lea.vmem %s5, %s416
      // Predicated region
      $region41: #{patch_embed_2d.1} parent=39 // pred_check
        %p418 = pneg %p149
      $region42: #{patch_embed_2d.1} parent=39 // pred_check_branch
        %420 = sbr.rel (%p418) target = $region44
      $region43: #{patch_embed_2d.1} parent=39 // pred_region
        _
      $region44: #{patch_embed_2d.1} parent=39 // pred_fallthru
        _
    $region40: #{patch_embed_2d.1} parent=5 // pred_fallthru
      _
    %p421 = scmp.le.s32.totalorder 2, %s11
    // Predicated region
    $region45: #{patch_embed_2d.1} parent=5 // pred_check
      %p422 = pneg %p421
    $region46: #{patch_embed_2d.1} parent=5 // pred_check_branch
      %424 = sbr.rel (%p422) target = $region48
    $region47: #{patch_embed_2d.1} parent=5 // pred_region
      %s425 = ssub.s32 %s11, 2
      // Predicated region
      $region49: #{patch_embed_2d.1} parent=47 // pred_check
        %p426 = pneg %p155
      $region50: #{patch_embed_2d.1} parent=47 // pred_check_branch
        %428 = sbr.rel (%p426) target = $region52
      $region51: #{patch_embed_2d.1} parent=47 // pred_region
        %p429 = scmp.lt.s32.totalorder %s17, 1
        %s430 = scalar_select %p429, %s17, 1
        %s431 = smul.addr %s430, 2
        %s432 = smul.addr %s431, 8
        %s433 = scalar_lea.vmem %s5, %s432
      $region52: #{patch_embed_2d.1} parent=47 // pred_fallthru
        _
    $region48: #{patch_embed_2d.1} parent=5 // pred_fallthru
      _
  $region6: #{patch_embed_2d.1} parent=0 // loop_footer
    %s15 = sadd.s32 1, %s11
  $region7: #{patch_embed_2d.1} parent=0 // loop_footer_branch
    %10 = sbr.rel target = $region3
  $region8: #{patch_embed_2d.1} parent=0 // loop_exit
    _

</llo_original>
